<compile_context>
chip_gen: v7x
topology: tpu7x:2x2x1
jax: 0.10.0
libtpu: 0.0.40
codegen_flags: <defaults>
</compile_context>

<pallas_src>
import jax
import jax.numpy as jnp
from jax.experimental import pallas as pl
from jax.experimental.pallas import tpu as pltpu


def _round_up(x, m):
    return ((x + m - 1) // m) * m


# ---------------------------------------------------------------------------
# Kernel
# ---------------------------------------------------------------------------
def _classifier_kernel(x_ref, w_enc_ref, w_cls_ref, b_cls_ref, out_ref, acc_ref):
    # x_ref:     [TM, TK]        f32 flattened-image tile (cast to bf16 per-tile)
    # w_enc_ref: [TK, L_pad]     bf16 stub "trained_model" projection, K-slice
    # w_cls_ref: [L_pad, NC_pad] bf16 classifier weight (resident, Buffered(1))
    # b_cls_ref: [1, NC_pad]     f32 classifier bias (resident, Buffered(1))
    # out_ref:   [TM, NC_pad]    f32 logits tile (written at last K step only)
    # acc_ref:   [TM, L_pad]     f32 latent accumulator (scratch, lives across K)
    k = pl.program_id(1)

    @pl.when(k == 0)
    def _():
        acc_ref[...] = jnp.zeros_like(acc_ref)

    # stub trained_model: image -> latents (bf16 MXU matmul, f32 accumulation).
    # x is cast to bf16 here (in-kernel) so the wrapper never re-writes x to HBM.
    acc_ref[...] += jnp.dot(
        x_ref[...].astype(jnp.bfloat16),
        w_enc_ref[...],
        preferred_element_type=jnp.float32,
    )

    @pl.when(k == pl.num_programs(1) - 1)
    def _():
        # self.relu(image_latents): done in f32 on the accumulator.
        latents = jnp.maximum(acc_ref[...], 0.0)

        # self.dropout(image_latents): identity at inference time (eval mode).

        # self.classifier(image_latents): Linear(latent_dim, num_classes).
        logits = jnp.dot(
            latents.astype(w_cls_ref.dtype),
            w_cls_ref[...],
            preferred_element_type=jnp.float32,
        )
        logits = logits + b_cls_ref[...]
        out_ref[...] = logits.astype(out_ref.dtype)


# ---------------------------------------------------------------------------
# One-time parameter preparation (hoisted out of the per-call path)
# ---------------------------------------------------------------------------
_MAX_TK = 2048   # K reduction tile cap (multiple of 128)
_MAX_TM = 256    # batch tile cap (MXU-aligned on v6e/v7x, fine on v5e)


def _k_tiling(d_in):
    # Single K block if d_in fits (block == full dim -> no 128-divisibility or
    # padding needed); otherwise tile by _MAX_TK and pad d_in up to a multiple.
    if d_in <= _MAX_TK:
        return d_in, d_in
    return _round_up(d_in, _MAX_TK), _MAX_TK


def _batch_tiling(B):
    # Single batch tile (== full batch, no padding) whenever B <= _MAX_TM: W_enc
    # then streams exactly once. Otherwise tile by _MAX_TM ("parallel" axis).
    if B <= _MAX_TM:
        return B, B
    return _round_up(B, _MAX_TM), _MAX_TM


def prepare_params(w_enc, w_cls, b_cls):
    """Pad + cast model parameters ONCE (call outside the per-inference path).

    w_enc: [d_in, latent_dim]   stub trained_model projection (x @ W layout)
    w_cls: [latent_dim, num_classes]
    b_cls: [num_classes]
    """
    d_in, latent_dim = w_enc.shape
    num_classes = w_cls.shape[1]

    L_pad = _round_up(latent_dim, 128)     # lane-dense latent dim
    NC_pad = _round_up(num_classes, 128)   # lane-dense output dim
    D_pad, TK = _k_tiling(d_in)

    if (D_pad, L_pad) == (d_in, latent_dim):
        w_enc_p = w_enc.astype(jnp.bfloat16)
    else:
        w_enc_p = jnp.zeros((D_pad, L_pad), jnp.bfloat16).at[:d_in, :latent_dim].set(
            w_enc.astype(jnp.bfloat16))
    if (L_pad, NC_pad) == (latent_dim, num_classes):
        w_cls_p = w_cls.astype(jnp.bfloat16)
    else:
        w_cls_p = jnp.zeros((L_pad, NC_pad), jnp.bfloat16).at[:latent_dim, :num_classes].set(
            w_cls.astype(jnp.bfloat16))
    b_cls_p = jnp.zeros((1, NC_pad), jnp.float32).at[0, :num_classes].set(
        b_cls.astype(jnp.float32))

    return {
        "w_enc_p": w_enc_p, "w_cls_p": w_cls_p, "b_cls_p": b_cls_p,
        "d_in": d_in, "latent_dim": latent_dim, "num_classes": num_classes,
        "L_pad": L_pad, "NC_pad": NC_pad, "D_pad": D_pad, "TK": TK,
    }


# ---------------------------------------------------------------------------
# Forward
# ---------------------------------------------------------------------------
def image_latents_classifier(x_nchw, params):
    """Forward pass of ImageLatentsClassifier (inference).

    x_nchw: [B, C, H, W] float32
    params: output of prepare_params()
    returns logits: [B, num_classes] float32
    """
    B = x_nchw.shape[0]
    d_in = params["d_in"]
    num_classes = params["num_classes"]
    L_pad, NC_pad = params["L_pad"], params["NC_pad"]
    D_pad, TK = params["D_pad"], params["TK"]
    w_enc_p, w_cls_p, b_cls_p = params["w_enc_p"], params["w_cls_p"], params["b_cls_p"]

    x = x_nchw.reshape(B, -1)          # flatten is free
    assert x.shape[1] == d_in, "input feature size mismatch vs prepared params"

    B_pad, TM = _batch_tiling(B)
    if (B_pad, D_pad) != (B, d_in):
        # Only materialize a padded copy of x when shapes actually require it
        # (padded rows/cols are zero and cancel; sliced off below).
        x = jnp.pad(x, ((0, B_pad - B), (0, D_pad - d_in)))

    num_b_tiles = B_pad // TM
    num_k_tiles = D_pad // TK
    grid = (num_b_tiles, num_k_tiles)

    # --- VMEM budget (per-tile working set) & explicit scoped limit ----------
    x_itemsize = x.dtype.itemsize
    vmem_bytes = (
        2 * TM * TK * x_itemsize        # x tile, double-buffered
        + 2 * TK * L_pad * 2            # W_enc K-slice (bf16), double-buffered
        + 1 * L_pad * NC_pad * 2        # W_cls resident, Buffered(1)
        + 1 * NC_pad * 4                # bias resident, Buffered(1)
        + TM * L_pad * 4                # f32 latent accumulator scratch
        + 2 * TM * NC_pad * 4           # output tile, double-buffered
    )
    # headroom, capped below v7x's 64 MiB physical VMEM per TC
    vmem_limit = min(int(vmem_bytes * 1.5) + (1 << 20), 48 * 1024 * 1024)

    cost = pl.CostEstimate(
        flops=2 * B_pad * D_pad * L_pad + 2 * B_pad * L_pad * NC_pad,
        transcendentals=0,
        bytes_accessed=(
            x.size * x_itemsize
            + w_enc_p.size * 2 * num_b_tiles   # W_enc streamed once per batch tile
            + w_cls_p.size * 2
            + b_cls_p.size * 4
            + B_pad * NC_pad * 4
        ),
    )

    out = pl.pallas_call(
        _classifier_kernel,
        out_shape=jax.ShapeDtypeStruct((B_pad, NC_pad), jnp.float32),
        grid_spec=pltpu.PrefetchScalarGridSpec(
            num_scalar_prefetch=0,
            grid=grid,
            in_specs=[
                pl.BlockSpec((TM, TK), lambda i, k: (i, k)),          # x tile (f32)
                pl.BlockSpec((TK, L_pad), lambda i, k: (k, 0)),       # W_enc K-slice
                pl.BlockSpec((L_pad, NC_pad), lambda i, k: (0, 0),
                             pipeline_mode=pl.Buffered(1)),           # W_cls resident
                pl.BlockSpec((1, NC_pad), lambda i, k: (0, 0),
                             pipeline_mode=pl.Buffered(1)),           # bias resident
            ],
            out_specs=pl.BlockSpec((TM, NC_pad), lambda i, k: (i, 0)),
            scratch_shapes=[pltpu.VMEM((TM, L_pad), jnp.float32)],
        ),
        compiler_params=pltpu.CompilerParams(
            dimension_semantics=("parallel", "arbitrary"),
            vmem_limit_bytes=vmem_limit,
        ),
        cost_estimate=cost,
    )(x, w_enc_p, w_cls_p, b_cls_p)

    # slice padding back off
    return out[:B, :num_classes]


# ---------------------------------------------------------------------------
# References
# ---------------------------------------------------------------------------
def _reference_f32(x_nchw, w_enc, w_cls, b_cls):
    B = x_nchw.shape[0]
    x_flat = x_nchw.reshape(B, -1)
    latents = jnp.maximum(x_flat @ w_enc, 0.0)
    return latents @ w_cls + b_cls[None, :]


def _reference_bf16_path(x_nchw, w_enc, w_cls, b_cls):
    # Mirrors the kernel's bf16-operand / f32-accumulate numerics.
    B = x_nchw.shape[0]
    x_flat = x_nchw.reshape(B, -1).astype(jnp.bfloat16)
    latents = jnp.dot(x_flat, w_enc.astype(jnp.bfloat16),
                      preferred_element_type=jnp.float32)
    latents = jnp.maximum(latents, 0.0)
    logits = jnp.dot(latents.astype(jnp.bfloat16), w_cls.astype(jnp.bfloat16),
                     preferred_element_type=jnp.float32)
    return logits + b_cls[None, :].astype(jnp.float32)


if __name__ == "__main__":
    # Small shapes consistent with the module's forward:
    # image x: [B=2, C=4, H=16, W=16] (NCHW), latent_dim=32, num_classes=8
    B, C, H, W = 2, 4, 16, 16
    latent_dim, num_classes = 32, 8

    key = jax.random.PRNGKey(0)
    kx, kenc, kcls, kb = jax.random.split(key, 4)

    x = jax.random.normal(kx, (B, C, H, W), dtype=jnp.float32)
    # Deterministic synthetic parameters (no checkpoint loading).
    w_enc = jax.random.normal(kenc, (C * H * W, latent_dim), dtype=jnp.float32) * 0.02
    w_cls = jax.random.normal(kcls, (latent_dim, num_classes), dtype=jnp.float32) * 0.1
    b_cls = jax.random.normal(kb, (num_classes,), dtype=jnp.float32) * 0.1

    # One-time weight preparation (pad + bf16 cast), outside the hot path.
    params = jax.tree_util.tree_map(
        lambda a: jax.block_until_ready(a) if isinstance(a, jax.Array) else a,
        prepare_params(w_enc, w_cls, b_cls))

    logits = jax.block_until_ready(image_latents_classifier(x, params))

    assert logits.shape == (B, num_classes)
    ref_bf16 = _reference_bf16_path(x, w_enc, w_cls, b_cls)
    assert jnp.allclose(logits, ref_bf16, atol=1e-2, rtol=1e-2), \
        "mismatch vs bf16-path reference"
    ref_f32 = _reference_f32(x, w_enc, w_cls, b_cls)
    assert jnp.allclose(logits, ref_f32, atol=1e-1, rtol=1e-1), \
        "mismatch vs f32 reference"

    print("KERNEL_OK")
</pallas_src>

<mosaic_0001>
module attributes {stable_mosaic.version = 11 : i64} {
  func.func @_classifier_kernel(%arg0: i32, %arg1: i32, %arg2: memref<2x1024xf32, #tpu.memory_space<vmem>>, %arg3: memref<1024x128xbf16, #tpu.memory_space<vmem>>, %arg4: memref<128x128xbf16, #tpu.memory_space<vmem>>, %arg5: memref<1x128xf32, #tpu.memory_space<vmem>>, %arg6: memref<2x128xf32, #tpu.memory_space<vmem>>, %arg7: memref<2x128xf32, #tpu.memory_space<vmem>>) attributes {dimension_semantics = [#tpu.dimension_semantics<parallel>, #tpu.dimension_semantics<arbitrary>], iteration_bounds = array<i64: 1, 1>, scalar_prefetch = 0 : i64, scratch_operands = 1 : i64, tpu.core_type = #tpu.core_type<tc>, window_params = [{transform_indices = @transform_0, window_bounds = array<i64: 2, 1024>}, {transform_indices = @transform_1, window_bounds = array<i64: 1024, 128>}, {pipeline_mode = #tpu.pipeline_mode<synchronous>, transform_indices = @transform_2, window_bounds = array<i64: 128, 128>}, {pipeline_mode = #tpu.pipeline_mode<synchronous>, transform_indices = @transform_3, window_bounds = array<i64: 1, 128>}, {transform_indices = @transform_4, window_bounds = array<i64: 2, 128>}]} {
    %c0_i32 = arith.constant 0 : i32
    %0 = arith.cmpi eq, %arg1, %c0_i32 : i32
    %1 = arith.extui %0 : i1 to i32
    %c0_i32_0 = arith.constant 0 : i32
    %2 = arith.cmpi ne, %1, %c0_i32_0 : i32
    scf.if %2 {
      %cst_10 = arith.constant 0.000000e+00 : f32
      %13 = vector.broadcast %cst_10 : f32 to vector<2x128xf32>
      %c0_11 = arith.constant 0 : index
      %c0_12 = arith.constant 0 : index
      %14 = vector.load %arg7[%c0_11, %c0_12] : memref<2x128xf32, #tpu.memory_space<vmem>>, vector<2x128xf32>
      tpu.vector_store %arg7[%c0_11, %c0_12], %13 {strides = array<i32>} : memref<2x128xf32, #tpu.memory_space<vmem>>, vector<2x128xf32>,
    } else {
    }
    %c0 = arith.constant 0 : index
    %c0_1 = arith.constant 0 : index
    %3 = vector.load %arg7[%c0, %c0_1] : memref<2x128xf32, #tpu.memory_space<vmem>>, vector<2x128xf32>
    %c0_2 = arith.constant 0 : index
    %c0_3 = arith.constant 0 : index
    %4 = vector.load %arg2[%c0_2, %c0_3] : memref<2x1024xf32, #tpu.memory_space<vmem>>, vector<2x1024xf32>
    %5 = arith.truncf %4 : vector<2x1024xf32> to vector<2x1024xbf16>
    %c0_4 = arith.constant 0 : index
    %c0_5 = arith.constant 0 : index
    %6 = vector.load %arg3[%c0_4, %c0_5] : memref<1024x128xbf16, #tpu.memory_space<vmem>>, vector<1024x128xbf16>
    %cst = arith.constant dense<0.000000e+00> : vector<2x128xf32>
    %7 = tpu.matmul %5, %6, %cst {dimension_numbers = #tpu.dot_dimension_numbers<[1], [0], [0], [1], [0, 0, 1, 1], [], []>} : vector<2x1024xbf16>, vector<1024x128xbf16>, vector<2x128xf32> -> vector<2x128xf32>
    %8 = arith.addf %3, %7 : vector<2x128xf32>
    %c0_6 = arith.constant 0 : index
    %c0_7 = arith.constant 0 : index
    %9 = vector.load %arg7[%c0_6, %c0_7] : memref<2x128xf32, #tpu.memory_space<vmem>>, vector<2x128xf32>
    tpu.vector_store %arg7[%c0_6, %c0_7], %8 {strides = array<i32>} : memref<2x128xf32, #tpu.memory_space<vmem>>, vector<2x128xf32>,
    %c0_i32_8 = arith.constant 0 : i32
    %10 = arith.cmpi eq, %arg1, %c0_i32_8 : i32
    %11 = arith.extui %10 : i1 to i32
    %c0_i32_9 = arith.constant 0 : i32
    %12 = arith.cmpi ne, %11, %c0_i32_9 : i32
    scf.if %12 {
      %c0_10 = arith.constant 0 : index
      %c0_11 = arith.constant 0 : index
      %13 = vector.load %arg7[%c0_10, %c0_11] : memref<2x128xf32, #tpu.memory_space<vmem>>, vector<2x128xf32>
      %cst_12 = arith.constant 0.000000e+00 : f32
      %14 = vector.broadcast %cst_12 : f32 to vector<2x128xf32>
      %15 = arith.maximumf %13, %14 : vector<2x128xf32>
      %16 = arith.truncf %15 : vector<2x128xf32> to vector<2x128xbf16>
      %c0_13 = arith.constant 0 : index
      %c0_14 = arith.constant 0 : index
      %17 = vector.load %arg4[%c0_13, %c0_14] : memref<128x128xbf16, #tpu.memory_space<vmem>>, vector<128x128xbf16>
      %cst_15 = arith.constant dense<0.000000e+00> : vector<2x128xf32>
      %18 = tpu.matmul %16, %17, %cst_15 {dimension_numbers = #tpu.dot_dimension_numbers<[1], [0], [0], [1], [0, 0, 1, 1], [], []>} : vector<2x128xbf16>, vector<128x128xbf16>, vector<2x128xf32> -> vector<2x128xf32>
      %c0_16 = arith.constant 0 : index
      %c0_17 = arith.constant 0 : index
      %19 = vector.load %arg5[%c0_16, %c0_17] : memref<1x128xf32, #tpu.memory_space<vmem>>, vector<1x128xf32>
      %20 = vector.broadcast %19 : vector<1x128xf32> to vector<2x128xf32>
      %21 = arith.addf %18, %20 : vector<2x128xf32>
      %c0_18 = arith.constant 0 : index
      %c0_19 = arith.constant 0 : index
      %22 = vector.load %arg6[%c0_18, %c0_19] : memref<2x128xf32, #tpu.memory_space<vmem>>, vector<2x128xf32>
      tpu.vector_store %arg6[%c0_18, %c0_19], %21 {strides = array<i32>} : memref<2x128xf32, #tpu.memory_space<vmem>>, vector<2x128xf32>,
    } else {
    }
    return
  }
  func.func @transform_0(%arg0: i32, %arg1: i32) -> (i32, i32) {
    %c0_i32 = arith.constant 0 : i32
    return %arg0, %arg1 : i32, i32
  }
  func.func @transform_1(%arg0: i32, %arg1: i32) -> (i32, i32) {
    %c0_i32 = arith.constant 0 : i32
    %c0_i32_0 = arith.constant 0 : i32
    return %arg1, %c0_i32 : i32, i32
  }
  func.func @transform_2(%arg0: i32, %arg1: i32) -> (i32, i32) {
    %c0_i32 = arith.constant 0 : i32
    %c0_i32_0 = arith.constant 0 : i32
    %c0_i32_1 = arith.constant 0 : i32
    return %c0_i32, %c0_i32_0 : i32, i32
  }
  func.func @transform_3(%arg0: i32, %arg1: i32) -> (i32, i32) {
    %c0_i32 = arith.constant 0 : i32
    %c0_i32_0 = arith.constant 0 : i32
    %c0_i32_1 = arith.constant 0 : i32
    return %c0_i32, %c0_i32_0 : i32, i32
  }
  func.func @transform_4(%arg0: i32, %arg1: i32) -> (i32, i32) {
    %c0_i32 = arith.constant 0 : i32
    %c0_i32_0 = arith.constant 0 : i32
    return %arg0, %c0_i32 : i32, i32
  }
}

</mosaic_0001>

<llo_original>
// kernel: tpu_custom_call.1
$region0: #{tpu_custom_call.1}
  #allocation0 [shape = 'u32[]', space=smem, size = 0x4, offset = 0x4, fixed_abs, tag = 'smem constant byte address 0x4 - core index']
  #allocation1 [shape = 'u32[144,128]{1,0:T(1,128)}', space=vmem, size = 0x12000, scoped, tag = 'internal scratch']
  #allocation2 [shape = 'f32[2,128]{1,0:T(2,128)}', space=vmem, size = 0x400, scoped, tag = 'scratch operand']
  %s0 = inlined_call_operand.hbm [shape: f32[2,1024], index: 0, kind: input, shape index: {}]
  %s1 = inlined_call_operand.hbm [shape: bf16[1024,128], index: 1, kind: input, shape index: {}]
  %s2 = inlined_call_operand.hbm [shape: bf16[128,128], index: 2, kind: input, shape index: {}]
  %s3 = inlined_call_operand.vmem [shape: f32[1,128], index: 3, kind: input, shape index: {}]
  %s4 = inlined_call_operand.hbm [shape: f32[2,128], index: 4, kind: output, shape index: {}]
  %s5 = sld [smem:[#allocation0]]
  $region46: #{tpu_custom_call.1} parent=0
    _
  %s7 = ssub.s32 1, %s5
  %s8 = scalar_select 0, %s7, %s5
  $region1: #{tpu_custom_call.1} parent=0
    #allocation3 [shape = 'u8[8192]{0}', space=vmem, size = 0x2000, scoped, tag = 'input window, operand 0, single buffered']
    #allocation4 [shape = 's32[1]{0}', space=sflag, size = 0x4, scoped, tag = 'scoped memory for tpu_custom_call.1']
    #allocation5 [shape = 's32[1]{0}', space=sflag, size = 0x4, scoped, tag = 'scoped memory for tpu_custom_call.1']
    #allocation6 [shape = 'u8[262144]{0}', space=vmem, size = 0x40000, scoped, tag = 'input window, operand 1, single buffered']
    #allocation7 [shape = 's32[1]{0}', space=sflag, size = 0x4, scoped, tag = 'scoped memory for tpu_custom_call.1']
    #allocation8 [shape = 'u8[32768]{0}', space=vmem, size = 0x8000, scoped, tag = 'input window, operand 2, single buffered']
    #allocation9 [shape = 'u8[1024]{0}', space=vmem, size = 0x400, scoped, tag = 'output window, operand 0, single buffered']
    %9 = vsyncpa [#allocation4], 0
    %10 = vsyncpa [#allocation7], 0
    %11 = vsyncpa [#allocation5], 0
    // Predicated region
    $region2: #{tpu_custom_call.1} parent=1 // pred_check
      _
    $region3: #{tpu_custom_call.1} parent=1 // pred_check_branch
      %13 = sbr.rel (0) target = $region5
    $region4: #{tpu_custom_call.1} parent=1 // pred_region
      %s15 = ssub.s32 256, 256
      %16 = vsyncadd [#allocation4], %s15
      %s18 = sshll.u32 [#allocation3], 4
      %s19 = int_to_ptr.vmem [resolvable:$true] %s18
      %21 = dma.hbm_to_vmem [thread:$0]  %s0, 256, %s19, [#allocation4]
    $region5: #{tpu_custom_call.1} parent=1 // pred_fallthru
      _
    // Predicated region
    $region6: #{tpu_custom_call.1} parent=1 // pred_check
      _
    $region7: #{tpu_custom_call.1} parent=1 // pred_check_branch
      %23 = sbr.rel (0) target = $region9
    $region8: #{tpu_custom_call.1} parent=1 // pred_region
      %s25 = ssub.s32 8192, 8192
      %26 = vsyncadd [#allocation7], %s25
      %s27 = sshll.u32 [#allocation6], 4
      %s28 = int_to_ptr.vmem [resolvable:$true] %s27
      %33 = dma.hbm_to_vmem [thread:$0]  %s1, 8192, %s28, [#allocation7], 64, 64, 4
    $region9: #{tpu_custom_call.1} parent=1 // pred_fallthru
      _
    // Predicated region
    $region10: #{tpu_custom_call.1} parent=1 // pred_check
      _
    $region11: #{tpu_custom_call.1} parent=1 // pred_check_branch
      %35 = sbr.rel (0) target = $region13
    $region12: #{tpu_custom_call.1} parent=1 // pred_region
      %s37 = ssub.s32 1024, 1024
      %38 = vsyncadd [#allocation7], %s37
      %s39 = sshll.u32 [#allocation8], 4
      %s40 = int_to_ptr.vmem [resolvable:$true] %s39
      %45 = dma.hbm_to_vmem [thread:$0]  %s2, 1024, %s40, [#allocation7], 64, 64, 4
    $region13: #{tpu_custom_call.1} parent=1 // pred_fallthru
      _
    // Predicated region
    $region14: #{tpu_custom_call.1} parent=1 // pred_check
      _
    $region15: #{tpu_custom_call.1} parent=1 // pred_check_branch
      %47 = sbr.rel (0) target = $region17
    $region16: #{tpu_custom_call.1} parent=1 // pred_region
      _
    $region17: #{tpu_custom_call.1} parent=1 // pred_fallthru
      _
    // Predicated region
    $region18: #{tpu_custom_call.1} parent=1 // pred_check
      _
    $region19: #{tpu_custom_call.1} parent=1 // pred_check_branch
      %49 = sbr.rel (0) target = $region21
    $region20: #{tpu_custom_call.1} parent=1 // pred_region
      %50 = dma.done [#allocation4], 256
    $region21: #{tpu_custom_call.1} parent=1 // pred_fallthru
      _
    // Predicated region
    $region22: #{tpu_custom_call.1} parent=1 // pred_check
      _
    $region23: #{tpu_custom_call.1} parent=1 // pred_check_branch
      %52 = sbr.rel (0) target = $region25
    $region24: #{tpu_custom_call.1} parent=1 // pred_region
      %53 = dma.done [#allocation7], 8192
    $region25: #{tpu_custom_call.1} parent=1 // pred_fallthru
      _
    // Predicated region
    $region26: #{tpu_custom_call.1} parent=1 // pred_check
      _
    $region27: #{tpu_custom_call.1} parent=1 // pred_check_branch
      %55 = sbr.rel (0) target = $region29
    $region28: #{tpu_custom_call.1} parent=1 // pred_region
      %56 = dma.done [#allocation7], 1024
    $region29: #{tpu_custom_call.1} parent=1 // pred_fallthru
      _
    %p58 = scmp.eq.s32.totalorder 0, 0
    // Predicated region
    $region30: #{tpu_custom_call.1} parent=1 // pred_check
      %p59 = pneg %p58
    $region31: #{tpu_custom_call.1} parent=1 // pred_check_branch
      %61 = sbr.rel (%p59) target = $region33
    $region32: #{tpu_custom_call.1} parent=1 // pred_region
      %62 = vst [vmem:[#allocation2] sm:$0x3] 0.0
    $region33: #{tpu_custom_call.1} parent=1 // pred_fallthru
      _
    %v63 = vld [vmem:[#allocation2] sm:$0x3]
    %v64 = vld [vmem:[#allocation3] sm:$0xff]
    %v65 = vld [vmem:[#allocation3 + $0x8] sm:$0xff]
    %v68 = vcombine.high %v64, %v64
    %v70 = vunpack.c.l.s4 1983009808
    %v71 = vunpack.c.0.s8 %v70
    %v72 = vlaneseq
    %v73 = vshrl.u32 %v72, 7
    %v74 = vsub.s32 %v71, %v73
    %v75 = vrot.slane %v64, %v74
    %v77 = vunpack.c.l.s4 1983009808
    %v78 = vunpack.c.0.s8 %v77
    %v79 = vlaneseq
    %v80 = vshrl.u32 %v79, 7
    %v81 = vsub.s32 %v78, %v80
    %v82 = vrot.slane %v68, %v81
    %v83 = vcombine.high %v75, %v75
    %v84 = vcombine.high %v82, %v82
    %v85 = vcombine.high %v65, %v65
    %v87 = vunpack.c.l.s4 1983009808
    %v88 = vunpack.c.0.s8 %v87
    %v89 = vlaneseq
    %v90 = vshrl.u32 %v89, 7
    %v91 = vsub.s32 %v88, %v90
    %v92 = vrot.slane %v65, %v91
    %v94 = vunpack.c.l.s4 1983009808
    %v95 = vunpack.c.0.s8 %v94
    %v96 = vlaneseq
    %v97 = vshrl.u32 %v96, 7
    %v98 = vsub.s32 %v95, %v97
    %v99 = vrot.slane %v85, %v98
    %v100 = vcombine.high %v92, %v92
    %v101 = vcombine.high %v99, %v99
    %v110 = vpack.c.bf16 %v75, %v75
    %v111 = vpack.c.bf16 %v83, %v83
    %v112 = vpack.c.bf16 %v82, %v82
    %v113 = vpack.c.bf16 %v84, %v84
    %v114 = vpack.c.bf16 %v92, %v92
    %v115 = vpack.c.bf16 %v100, %v100
    %v116 = vpack.c.bf16 %v99, %v99
    %v117 = vpack.c.bf16 %v101, %v101
    %v118 = vld [vmem:[#allocation6] sm:$0xf]
    %v119 = vld [vmem:[#allocation6 + $0x4] sm:$0xf]
    %v120 = vld [vmem:[#allocation6 + $0x8] sm:$0xf]
    %v121 = vld [vmem:[#allocation6 + $0xc] sm:$0xf]
    %v122 = vld [vmem:[#allocation6 + $0x10] sm:$0xf]
    %v123 = vld [vmem:[#allocation6 + $0x14] sm:$0xf]
    %v124 = vld [vmem:[#allocation6 + $0x18] sm:$0xf]
    %v125 = vld [vmem:[#allocation6 + $0x1c] sm:$0xf]
    %v126 = vld [vmem:[#allocation6 + $0x20] sm:$0xf]
    %v127 = vld [vmem:[#allocation6 + $0x24] sm:$0xf]
    %v128 = vld [vmem:[#allocation6 + $0x28] sm:$0xf]
    %v129 = vld [vmem:[#allocation6 + $0x2c] sm:$0xf]
    %v130 = vld [vmem:[#allocation6 + $0x30] sm:$0xf]
    %v131 = vld [vmem:[#allocation6 + $0x34] sm:$0xf]
    %v132 = vld [vmem:[#allocation6 + $0x38] sm:$0xf]
    %v133 = vld [vmem:[#allocation6 + $0x3c] sm:$0xf]
    %v134 = vld [vmem:[#allocation6 + $0x40] sm:$0xf]
    %v135 = vld [vmem:[#allocation6 + $0x44] sm:$0xf]
    %v136 = vld [vmem:[#allocation6 + $0x48] sm:$0xf]
    %v137 = vld [vmem:[#allocation6 + $0x4c] sm:$0xf]
    %v138 = vld [vmem:[#allocation6 + $0x50] sm:$0xf]
    %v139 = vld [vmem:[#allocation6 + $0x54] sm:$0xf]
    %v140 = vld [vmem:[#allocation6 + $0x58] sm:$0xf]
    %v141 = vld [vmem:[#allocation6 + $0x5c] sm:$0xf]
    %v142 = vld [vmem:[#allocation6 + $0x60] sm:$0xf]
    %v143 = vld [vmem:[#allocation6 + $0x64] sm:$0xf]
    %v144 = vld [vmem:[#allocation6 + $0x68] sm:$0xf]
    %v145 = vld [vmem:[#allocation6 + $0x6c] sm:$0xf]
    %v146 = vld [vmem:[#allocation6 + $0x70] sm:$0xf]
    %v147 = vld [vmem:[#allocation6 + $0x74] sm:$0xf]
    %v148 = vld [vmem:[#allocation6 + $0x78] sm:$0xf]
    %v149 = vld [vmem:[#allocation6 + $0x7c] sm:$0xf]
    %v150 = vld [vmem:[#allocation6 + $0x80] sm:$0xf]
    %v151 = vld [vmem:[#allocation6 + $0x84] sm:$0xf]
    %v152 = vld [vmem:[#allocation6 + $0x88] sm:$0xf]
    %v153 = vld [vmem:[#allocation6 + $0x8c] sm:$0xf]
    %v154 = vld [vmem:[#allocation6 + $0x90] sm:$0xf]
    %v155 = vld [vmem:[#allocation6 + $0x94] sm:$0xf]
    %v156 = vld [vmem:[#allocation6 + $0x98] sm:$0xf]
    %v157 = vld [vmem:[#allocation6 + $0x9c] sm:$0xf]
    %v158 = vld [vmem:[#allocation6 + $0xa0] sm:$0xf]
    %v159 = vld [vmem:[#allocation6 + $0xa4] sm:$0xf]
    %v160 = vld [vmem:[#allocation6 + $0xa8] sm:$0xf]
    %v161 = vld [vmem:[#allocation6 + $0xac] sm:$0xf]
    %v162 = vld [vmem:[#allocation6 + $0xb0] sm:$0xf]
    %v163 = vld [vmem:[#allocation6 + $0xb4] sm:$0xf]
    %v164 = vld [vmem:[#allocation6 + $0xb8] sm:$0xf]
    %v165 = vld [vmem:[#allocation6 + $0xbc] sm:$0xf]
    %v166 = vld [vmem:[#allocation6 + $0xc0] sm:$0xf]
    %v167 = vld [vmem:[#allocation6 + $0xc4] sm:$0xf]
    %v168 = vld [vmem:[#allocation6 + $0xc8] sm:$0xf]
    %v169 = vld [vmem:[#allocation6 + $0xcc] sm:$0xf]
    %v170 = vld [vmem:[#allocation6 + $0xd0] sm:$0xf]
    %v171 = vld [vmem:[#allocation6 + $0xd4] sm:$0xf]
    %v172 = vld [vmem:[#allocation6 + $0xd8] sm:$0xf]
    %v173 = vld [vmem:[#allocation6 + $0xdc] sm:$0xf]
    %v174 = vld [vmem:[#allocation6 + $0xe0] sm:$0xf]
    %v175 = vld [vmem:[#allocation6 + $0xe4] sm:$0xf]
    %v176 = vld [vmem:[#allocation6 + $0xe8] sm:$0xf]
    %v177 = vld [vmem:[#allocation6 + $0xec] sm:$0xf]
    %v178 = vld [vmem:[#allocation6 + $0xf0] sm:$0xf]
    %v179 = vld [vmem:[#allocation6 + $0xf4] sm:$0xf]
    %v180 = vld [vmem:[#allocation6 + $0xf8] sm:$0xf]
    %v181 = vld [vmem:[#allocation6 + $0xfc] sm:$0xf]
    %v182 = vld [vmem:[#allocation6 + $0x100] sm:$0xf]
    %v183 = vld [vmem:[#allocation6 + $0x104] sm:$0xf]
    %v184 = vld [vmem:[#allocation6 + $0x108] sm:$0xf]
    %v185 = vld [vmem:[#allocation6 + $0x10c] sm:$0xf]
    %v186 = vld [vmem:[#allocation6 + $0x110] sm:$0xf]
    %v187 = vld [vmem:[#allocation6 + $0x114] sm:$0xf]
    %v188 = vld [vmem:[#allocation6 + $0x118] sm:$0xf]
    %v189 = vld [vmem:[#allocation6 + $0x11c] sm:$0xf]
    %v190 = vld [vmem:[#allocation6 + $0x120] sm:$0xf]
    %v191 = vld [vmem:[#allocation6 + $0x124] sm:$0xf]
    %v192 = vld [vmem:[#allocation6 + $0x128] sm:$0xf]
    %v193 = vld [vmem:[#allocation6 + $0x12c] sm:$0xf]
    %v194 = vld [vmem:[#allocation6 + $0x130] sm:$0xf]
    %v195 = vld [vmem:[#allocation6 + $0x134] sm:$0xf]
    %v196 = vld [vmem:[#allocation6 + $0x138] sm:$0xf]
    %v197 = vld [vmem:[#allocation6 + $0x13c] sm:$0xf]
    %v198 = vld [vmem:[#allocation6 + $0x140] sm:$0xf]
    %v199 = vld [vmem:[#allocation6 + $0x144] sm:$0xf]
    %v200 = vld [vmem:[#allocation6 + $0x148] sm:$0xf]
    %v201 = vld [vmem:[#allocation6 + $0x14c] sm:$0xf]
    %v202 = vld [vmem:[#allocation6 + $0x150] sm:$0xf]
    %v203 = vld [vmem:[#allocation6 + $0x154] sm:$0xf]
    %v204 = vld [vmem:[#allocation6 + $0x158] sm:$0xf]
    %v205 = vld [vmem:[#allocation6 + $0x15c] sm:$0xf]
    %v206 = vld [vmem:[#allocation6 + $0x160] sm:$0xf]
    %v207 = vld [vmem:[#allocation6 + $0x164] sm:$0xf]
    %v208 = vld [vmem:[#allocation6 + $0x168] sm:$0xf]
    %v209 = vld [vmem:[#allocation6 + $0x16c] sm:$0xf]
    %v210 = vld [vmem:[#allocation6 + $0x170] sm:$0xf]
    %v211 = vld [vmem:[#allocation6 + $0x174] sm:$0xf]
    %v212 = vld [vmem:[#allocation6 + $0x178] sm:$0xf]
    %v213 = vld [vmem:[#allocation6 + $0x17c] sm:$0xf]
    %v214 = vld [vmem:[#allocation6 + $0x180] sm:$0xf]
    %v215 = vld [vmem:[#allocation6 + $0x184] sm:$0xf]
    %v216 = vld [vmem:[#allocation6 + $0x188] sm:$0xf]
    %v217 = vld [vmem:[#allocation6 + $0x18c] sm:$0xf]
    %v218 = vld [vmem:[#allocation6 + $0x190] sm:$0xf]
    %v219 = vld [vmem:[#allocation6 + $0x194] sm:$0xf]
    %v220 = vld [vmem:[#allocation6 + $0x198] sm:$0xf]
    %v221 = vld [vmem:[#allocation6 + $0x19c] sm:$0xf]
    %v222 = vld [vmem:[#allocation6 + $0x1a0] sm:$0xf]
    %v223 = vld [vmem:[#allocation6 + $0x1a4] sm:$0xf]
    %v224 = vld [vmem:[#allocation6 + $0x1a8] sm:$0xf]
    %v225 = vld [vmem:[#allocation6 + $0x1ac] sm:$0xf]
    %v226 = vld [vmem:[#allocation6 + $0x1b0] sm:$0xf]
    %v227 = vld [vmem:[#allocation6 + $0x1b4] sm:$0xf]
    %v228 = vld [vmem:[#allocation6 + $0x1b8] sm:$0xf]
    %v229 = vld [vmem:[#allocation6 + $0x1bc] sm:$0xf]
    %v230 = vld [vmem:[#allocation6 + $0x1c0] sm:$0xf]
    %v231 = vld [vmem:[#allocation6 + $0x1c4] sm:$0xf]
    %v232 = vld [vmem:[#allocation6 + $0x1c8] sm:$0xf]
    %v233 = vld [vmem:[#allocation6 + $0x1cc] sm:$0xf]
    %v234 = vld [vmem:[#allocation6 + $0x1d0] sm:$0xf]
    %v235 = vld [vmem:[#allocation6 + $0x1d4] sm:$0xf]
    %v236 = vld [vmem:[#allocation6 + $0x1d8] sm:$0xf]
    %v237 = vld [vmem:[#allocation6 + $0x1dc] sm:$0xf]
    %v238 = vld [vmem:[#allocation6 + $0x1e0] sm:$0xf]
    %v239 = vld [vmem:[#allocation6 + $0x1e4] sm:$0xf]
    %v240 = vld [vmem:[#allocation6 + $0x1e8] sm:$0xf]
    %v241 = vld [vmem:[#allocation6 + $0x1ec] sm:$0xf]
    %v242 = vld [vmem:[#allocation6 + $0x1f0] sm:$0xf]
    %v243 = vld [vmem:[#allocation6 + $0x1f4] sm:$0xf]
    %v244 = vld [vmem:[#allocation6 + $0x1f8] sm:$0xf]
    %v245 = vld [vmem:[#allocation6 + $0x1fc] sm:$0xf]
    %v374 = vunpack.c.l.b16 %v118
    %v375 = vunpack.c.l.b16 %v119
    %v376 = vunpack.c.l.b16 %v120
    %v377 = vunpack.c.l.b16 %v121
    %v378 = vunpack.c.l.b16 %v122
    %v379 = vunpack.c.l.b16 %v123
    %v380 = vunpack.c.l.b16 %v124
    %v381 = vunpack.c.l.b16 %v125
    %v382 = vunpack.c.l.b16 %v126
    %v383 = vunpack.c.l.b16 %v127
    %v384 = vunpack.c.l.b16 %v128
    %v385 = vunpack.c.l.b16 %v129
    %v386 = vunpack.c.l.b16 %v130
    %v387 = vunpack.c.l.b16 %v131
    %v388 = vunpack.c.l.b16 %v132
    %v389 = vunpack.c.l.b16 %v133
    %v390 = vunpack.c.l.b16 %v134
    %v391 = vunpack.c.l.b16 %v135
    %v392 = vunpack.c.l.b16 %v136
    %v393 = vunpack.c.l.b16 %v137
    %v394 = vunpack.c.l.b16 %v138
    %v395 = vunpack.c.l.b16 %v139
    %v396 = vunpack.c.l.b16 %v140
    %v397 = vunpack.c.l.b16 %v141
    %v398 = vunpack.c.l.b16 %v142
    %v399 = vunpack.c.l.b16 %v143
    %v400 = vunpack.c.l.b16 %v144
    %v401 = vunpack.c.l.b16 %v145
    %v402 = vunpack.c.l.b16 %v146
    %v403 = vunpack.c.l.b16 %v147
    %v404 = vunpack.c.l.b16 %v148
    %v405 = vunpack.c.l.b16 %v149
    %v406 = vunpack.c.l.b16 %v150
    %v407 = vunpack.c.l.b16 %v151
    %v408 = vunpack.c.l.b16 %v152
    %v409 = vunpack.c.l.b16 %v153
    %v410 = vunpack.c.l.b16 %v154
    %v411 = vunpack.c.l.b16 %v155
    %v412 = vunpack.c.l.b16 %v156
    %v413 = vunpack.c.l.b16 %v157
    %v414 = vunpack.c.l.b16 %v158
    %v415 = vunpack.c.l.b16 %v159
    %v416 = vunpack.c.l.b16 %v160
    %v417 = vunpack.c.l.b16 %v161
    %v418 = vunpack.c.l.b16 %v162
    %v419 = vunpack.c.l.b16 %v163
    %v420 = vunpack.c.l.b16 %v164
    %v421 = vunpack.c.l.b16 %v165
    %v422 = vunpack.c.l.b16 %v166
    %v423 = vunpack.c.l.b16 %v167
    %v424 = vunpack.c.l.b16 %v168
    %v425 = vunpack.c.l.b16 %v169
    %v426 = vunpack.c.l.b16 %v170
    %v427 = vunpack.c.l.b16 %v171
    %v428 = vunpack.c.l.b16 %v172
    %v429 = vunpack.c.l.b16 %v173
    %v430 = vunpack.c.l.b16 %v174
    %v431 = vunpack.c.l.b16 %v175
    %v432 = vunpack.c.l.b16 %v176
    %v433 = vunpack.c.l.b16 %v177
    %v434 = vunpack.c.l.b16 %v178
    %v435 = vunpack.c.l.b16 %v179
    %v436 = vunpack.c.l.b16 %v180
    %v437 = vunpack.c.l.b16 %v181
    %v438 = vunpack.c.l.b16 %v182
    %v439 = vunpack.c.l.b16 %v183
    %v440 = vunpack.c.l.b16 %v184
    %v441 = vunpack.c.l.b16 %v185
    %v442 = vunpack.c.l.b16 %v186
    %v443 = vunpack.c.l.b16 %v187
    %v444 = vunpack.c.l.b16 %v188
    %v445 = vunpack.c.l.b16 %v189
    %v446 = vunpack.c.l.b16 %v190
    %v447 = vunpack.c.l.b16 %v191
    %v448 = vunpack.c.l.b16 %v192
    %v449 = vunpack.c.l.b16 %v193
    %v450 = vunpack.c.l.b16 %v194
    %v451 = vunpack.c.l.b16 %v195
    %v452 = vunpack.c.l.b16 %v196
    %v453 = vunpack.c.l.b16 %v197
    %v454 = vunpack.c.l.b16 %v198
    %v455 = vunpack.c.l.b16 %v199
    %v456 = vunpack.c.l.b16 %v200
    %v457 = vunpack.c.l.b16 %v201
    %v458 = vunpack.c.l.b16 %v202
    %v459 = vunpack.c.l.b16 %v203
    %v460 = vunpack.c.l.b16 %v204
    %v461 = vunpack.c.l.b16 %v205
    %v462 = vunpack.c.l.b16 %v206
    %v463 = vunpack.c.l.b16 %v207
    %v464 = vunpack.c.l.b16 %v208
    %v465 = vunpack.c.l.b16 %v209
    %v466 = vunpack.c.l.b16 %v210
    %v467 = vunpack.c.l.b16 %v211
    %v468 = vunpack.c.l.b16 %v212
    %v469 = vunpack.c.l.b16 %v213
    %v470 = vunpack.c.l.b16 %v214
    %v471 = vunpack.c.l.b16 %v215
    %v472 = vunpack.c.l.b16 %v216
    %v473 = vunpack.c.l.b16 %v217
    %v474 = vunpack.c.l.b16 %v218
    %v475 = vunpack.c.l.b16 %v219
    %v476 = vunpack.c.l.b16 %v220
    %v477 = vunpack.c.l.b16 %v221
    %v478 = vunpack.c.l.b16 %v222
    %v479 = vunpack.c.l.b16 %v223
    %v480 = vunpack.c.l.b16 %v224
    %v481 = vunpack.c.l.b16 %v225
    %v482 = vunpack.c.l.b16 %v226
    %v483 = vunpack.c.l.b16 %v227
    %v484 = vunpack.c.l.b16 %v228
    %v485 = vunpack.c.l.b16 %v229
    %v486 = vunpack.c.l.b16 %v230
    %v487 = vunpack.c.l.b16 %v231
    %v488 = vunpack.c.l.b16 %v232
    %v489 = vunpack.c.l.b16 %v233
    %v490 = vunpack.c.l.b16 %v234
    %v491 = vunpack.c.l.b16 %v235
    %v492 = vunpack.c.l.b16 %v236
    %v493 = vunpack.c.l.b16 %v237
    %v494 = vunpack.c.l.b16 %v238
    %v495 = vunpack.c.l.b16 %v239
    %v496 = vunpack.c.l.b16 %v240
    %v497 = vunpack.c.l.b16 %v241
    %v498 = vunpack.c.l.b16 %v242
    %v499 = vunpack.c.l.b16 %v243
    %v500 = vunpack.c.l.b16 %v244
    %v501 = vunpack.c.l.b16 %v245
    %v502 = vpack.c.b16 %v375, %v374
    %v503 = vpack.c.b16 %v377, %v376
    %v504 = vpack.c.b16 %v379, %v378
    %v505 = vpack.c.b16 %v381, %v380
    %v506 = vpack.c.b16 %v383, %v382
    %v507 = vpack.c.b16 %v385, %v384
    %v508 = vpack.c.b16 %v387, %v386
    %v509 = vpack.c.b16 %v389, %v388
    %v510 = vpack.c.b16 %v391, %v390
    %v511 = vpack.c.b16 %v393, %v392
    %v512 = vpack.c.b16 %v395, %v394
    %v513 = vpack.c.b16 %v397, %v396
    %v514 = vpack.c.b16 %v399, %v398
    %v515 = vpack.c.b16 %v401, %v400
    %v516 = vpack.c.b16 %v403, %v402
    %v517 = vpack.c.b16 %v405, %v404
    %v518 = vpack.c.b16 %v407, %v406
    %v519 = vpack.c.b16 %v409, %v408
    %v520 = vpack.c.b16 %v411, %v410
    %v521 = vpack.c.b16 %v413, %v412
    %v522 = vpack.c.b16 %v415, %v414
    %v523 = vpack.c.b16 %v417, %v416
    %v524 = vpack.c.b16 %v419, %v418
    %v525 = vpack.c.b16 %v421, %v420
    %v526 = vpack.c.b16 %v423, %v422
    %v527 = vpack.c.b16 %v425, %v424
    %v528 = vpack.c.b16 %v427, %v426
    %v529 = vpack.c.b16 %v429, %v428
    %v530 = vpack.c.b16 %v431, %v430
    %v531 = vpack.c.b16 %v433, %v432
    %v532 = vpack.c.b16 %v435, %v434
    %v533 = vpack.c.b16 %v437, %v436
    %v534 = vpack.c.b16 %v439, %v438
    %v535 = vpack.c.b16 %v441, %v440
    %v536 = vpack.c.b16 %v443, %v442
    %v537 = vpack.c.b16 %v445, %v444
    %v538 = vpack.c.b16 %v447, %v446
    %v539 = vpack.c.b16 %v449, %v448
    %v540 = vpack.c.b16 %v451, %v450
    %v541 = vpack.c.b16 %v453, %v452
    %v542 = vpack.c.b16 %v455, %v454
    %v543 = vpack.c.b16 %v457, %v456
    %v544 = vpack.c.b16 %v459, %v458
    %v545 = vpack.c.b16 %v461, %v460
    %v546 = vpack.c.b16 %v463, %v462
    %v547 = vpack.c.b16 %v465, %v464
    %v548 = vpack.c.b16 %v467, %v466
    %v549 = vpack.c.b16 %v469, %v468
    %v550 = vpack.c.b16 %v471, %v470
    %v551 = vpack.c.b16 %v473, %v472
    %v552 = vpack.c.b16 %v475, %v474
    %v553 = vpack.c.b16 %v477, %v476
    %v554 = vpack.c.b16 %v479, %v478
    %v555 = vpack.c.b16 %v481, %v480
    %v556 = vpack.c.b16 %v483, %v482
    %v557 = vpack.c.b16 %v485, %v484
    %v558 = vpack.c.b16 %v487, %v486
    %v559 = vpack.c.b16 %v489, %v488
    %v560 = vpack.c.b16 %v491, %v490
    %v561 = vpack.c.b16 %v493, %v492
    %v562 = vpack.c.b16 %v495, %v494
    %v563 = vpack.c.b16 %v497, %v496
    %v564 = vpack.c.b16 %v499, %v498
    %v565 = vpack.c.b16 %v501, %v500
    %630 = vmatprep.subr.bf16.mxu0 0
    %631 = vmatpush1.bf16.msra.mxu0 %v502
    %632 = vmatprep.subr.bf16.mxu0 0
    %633 = vmatpush1.bf16.msra.mxu0 %v503
    %634 = vmatprep.subr.bf16.mxu0 0
    %635 = vmatpush1.bf16.msra.mxu0 %v504
    %636 = vmatprep.subr.bf16.mxu0 0
    %637 = vmatpush1.bf16.msra.mxu0 %v505
    %638 = vmatprep.subr.bf16.mxu0 0
    %639 = vmatpush1.bf16.msra.mxu0 %v506
    %640 = vmatprep.subr.bf16.mxu0 0
    %641 = vmatpush1.bf16.msra.mxu0 %v507
    %642 = vmatprep.subr.bf16.mxu0 0
    %643 = vmatpush1.bf16.msra.mxu0 %v508
    %644 = vmatprep.subr.bf16.mxu0 0
    %645 = vmatpush1.bf16.msra.mxu0 %v509
    %646 = vmatprep.subr.bf16.mxu0 0
    %647 = vmatpush1.bf16.msra.mxu0 %v510
    %648 = vmatprep.subr.bf16.mxu0 0
    %649 = vmatpush1.bf16.msra.mxu0 %v511
    %650 = vmatprep.subr.bf16.mxu0 0
    %651 = vmatpush1.bf16.msra.mxu0 %v512
    %652 = vmatprep.subr.bf16.mxu0 0
    %653 = vmatpush1.bf16.msra.mxu0 %v513
    %654 = vmatprep.subr.bf16.mxu0 0
    %655 = vmatpush1.bf16.msra.mxu0 %v514
    %656 = vmatprep.subr.bf16.mxu0 0
    %657 = vmatpush1.bf16.msra.mxu0 %v515
    %658 = vmatprep.subr.bf16.mxu0 0
    %659 = vmatpush1.bf16.msra.mxu0 %v516
    %660 = vmatprep.subr.bf16.mxu0 0
    %661 = vmatpush1.bf16.msra.mxu0 %v517
    %662 = vmatprep.mubr.bf16.mxu0 %v111
    %663 = vmatmul.mubr.bf16.gmra.mrb[0].mxu0 %v110
    %v664 = vpop.f32.mrb[0].mxu0
    %v665 = vadd.f32 0.0, %v664
    %v666 = vpop.f32.mrb[0].mxu0
    %v667 = vpop.f32.mrb[0].mxu0
    %v668 = vpop.f32.mrb[0].mxu0
    %669 = vdwg.mxu0
    %670 = vmatprep.subr.bf16.mxu0 0
    %671 = vmatpush1.bf16.msra.mxu0 %v518
    %672 = vmatprep.subr.bf16.mxu0 0
    %673 = vmatpush1.bf16.msra.mxu0 %v519
    %674 = vmatprep.subr.bf16.mxu0 0
    %675 = vmatpush1.bf16.msra.mxu0 %v520
    %676 = vmatprep.subr.bf16.mxu0 0
    %677 = vmatpush1.bf16.msra.mxu0 %v521
    %678 = vmatprep.subr.bf16.mxu0 0
    %679 = vmatpush1.bf16.msra.mxu0 %v522
    %680 = vmatprep.subr.bf16.mxu0 0
    %681 = vmatpush1.bf16.msra.mxu0 %v523
    %682 = vmatprep.subr.bf16.mxu0 0
    %683 = vmatpush1.bf16.msra.mxu0 %v524
    %684 = vmatprep.subr.bf16.mxu0 0
    %685 = vmatpush1.bf16.msra.mxu0 %v525
    %686 = vmatprep.subr.bf16.mxu0 0
    %687 = vmatpush1.bf16.msra.mxu0 %v526
    %688 = vmatprep.subr.bf16.mxu0 0
    %689 = vmatpush1.bf16.msra.mxu0 %v527
    %690 = vmatprep.subr.bf16.mxu0 0
    %691 = vmatpush1.bf16.msra.mxu0 %v528
    %692 = vmatprep.subr.bf16.mxu0 0
    %693 = vmatpush1.bf16.msra.mxu0 %v529
    %694 = vmatprep.subr.bf16.mxu0 0
    %695 = vmatpush1.bf16.msra.mxu0 %v530
    %696 = vmatprep.subr.bf16.mxu0 0
    %697 = vmatpush1.bf16.msra.mxu0 %v531
    %698 = vmatprep.subr.bf16.mxu0 0
    %699 = vmatpush1.bf16.msra.mxu0 %v532
    %700 = vmatprep.subr.bf16.mxu0 0
    %701 = vmatpush1.bf16.msra.mxu0 %v533
    %702 = vmatprep.mubr.bf16.mxu0 %v113
    %703 = vmatmul.mubr.bf16.gmra.mrb[0].mxu0 %v112
    %v704 = vpop.f32.mrb[0].mxu0
    %v705 = vadd.f32 %v665, %v704
    %v706 = vpop.f32.mrb[0].mxu0
    %v707 = vpop.f32.mrb[0].mxu0
    %v708 = vpop.f32.mrb[0].mxu0
    %709 = vdwg.mxu0
    %710 = vmatprep.subr.bf16.mxu0 0
    %711 = vmatpush1.bf16.msra.mxu0 %v534
    %712 = vmatprep.subr.bf16.mxu0 0
    %713 = vmatpush1.bf16.msra.mxu0 %v535
    %714 = vmatprep.subr.bf16.mxu0 0
    %715 = vmatpush1.bf16.msra.mxu0 %v536
    %716 = vmatprep.subr.bf16.mxu0 0
    %717 = vmatpush1.bf16.msra.mxu0 %v537
    %718 = vmatprep.subr.bf16.mxu0 0
    %719 = vmatpush1.bf16.msra.mxu0 %v538
    %720 = vmatprep.subr.bf16.mxu0 0
    %721 = vmatpush1.bf16.msra.mxu0 %v539
    %722 = vmatprep.subr.bf16.mxu0 0
    %723 = vmatpush1.bf16.msra.mxu0 %v540
    %724 = vmatprep.subr.bf16.mxu0 0
    %725 = vmatpush1.bf16.msra.mxu0 %v541
    %726 = vmatprep.subr.bf16.mxu0 0
    %727 = vmatpush1.bf16.msra.mxu0 %v542
    %728 = vmatprep.subr.bf16.mxu0 0
    %729 = vmatpush1.bf16.msra.mxu0 %v543
    %730 = vmatprep.subr.bf16.mxu0 0
    %731 = vmatpush1.bf16.msra.mxu0 %v544
    %732 = vmatprep.subr.bf16.mxu0 0
    %733 = vmatpush1.bf16.msra.mxu0 %v545
    %734 = vmatprep.subr.bf16.mxu0 0
    %735 = vmatpush1.bf16.msra.mxu0 %v546
    %736 = vmatprep.subr.bf16.mxu0 0
    %737 = vmatpush1.bf16.msra.mxu0 %v547
    %738 = vmatprep.subr.bf16.mxu0 0
    %739 = vmatpush1.bf16.msra.mxu0 %v548
    %740 = vmatprep.subr.bf16.mxu0 0
    %741 = vmatpush1.bf16.msra.mxu0 %v549
    %742 = vmatprep.mubr.bf16.mxu0 %v115
    %743 = vmatmul.mubr.bf16.gmra.mrb[0].mxu0 %v114
    %v744 = vpop.f32.mrb[0].mxu0
    %v745 = vadd.f32 %v705, %v744
    %v746 = vpop.f32.mrb[0].mxu0
    %v747 = vpop.f32.mrb[0].mxu0
    %v748 = vpop.f32.mrb[0].mxu0
    %749 = vdwg.mxu0
    %750 = vmatprep.subr.bf16.mxu0 0
    %751 = vmatpush1.bf16.msra.mxu0 %v550
    %752 = vmatprep.subr.bf16.mxu0 0
    %753 = vmatpush1.bf16.msra.mxu0 %v551
    %754 = vmatprep.subr.bf16.mxu0 0
    %755 = vmatpush1.bf16.msra.mxu0 %v552
    %756 = vmatprep.subr.bf16.mxu0 0
    %757 = vmatpush1.bf16.msra.mxu0 %v553
    %758 = vmatprep.subr.bf16.mxu0 0
    %759 = vmatpush1.bf16.msra.mxu0 %v554
    %760 = vmatprep.subr.bf16.mxu0 0
    %761 = vmatpush1.bf16.msra.mxu0 %v555
    %762 = vmatprep.subr.bf16.mxu0 0
    %763 = vmatpush1.bf16.msra.mxu0 %v556
    %764 = vmatprep.subr.bf16.mxu0 0
    %765 = vmatpush1.bf16.msra.mxu0 %v557
    %766 = vmatprep.subr.bf16.mxu0 0
    %767 = vmatpush1.bf16.msra.mxu0 %v558
    %768 = vmatprep.subr.bf16.mxu0 0
    %769 = vmatpush1.bf16.msra.mxu0 %v559
    %770 = vmatprep.subr.bf16.mxu0 0
    %771 = vmatpush1.bf16.msra.mxu0 %v560
    %772 = vmatprep.subr.bf16.mxu0 0
    %773 = vmatpush1.bf16.msra.mxu0 %v561
    %774 = vmatprep.subr.bf16.mxu0 0
    %775 = vmatpush1.bf16.msra.mxu0 %v562
    %776 = vmatprep.subr.bf16.mxu0 0
    %777 = vmatpush1.bf16.msra.mxu0 %v563
    %778 = vmatprep.subr.bf16.mxu0 0
    %779 = vmatpush1.bf16.msra.mxu0 %v564
    %780 = vmatprep.subr.bf16.mxu0 0
    %781 = vmatpush1.bf16.msra.mxu0 %v565
    %782 = vmatprep.mubr.bf16.mxu0 %v117
    %783 = vmatmul.mubr.bf16.gmra.mrb[0].mxu0 %v116
    %v784 = vpop.f32.mrb[0].mxu0
    %v785 = vadd.f32 %v745, %v784
    %v786 = vpop.f32.mrb[0].mxu0
    %v787 = vpop.f32.mrb[0].mxu0
    %v788 = vpop.f32.mrb[0].mxu0
    %789 = vdwg.mxu0
    %v790 = vadd.f32 %v63, %v785
    %791 = vst [vmem:[#allocation2] sm:$0x3] %v790
    // Predicated region
    $region34: #{tpu_custom_call.1} parent=1 // pred_check
      %p792 = pneg %p58
    $region35: #{tpu_custom_call.1} parent=1 // pred_check_branch
      %794 = sbr.rel (%p792) target = $region37
    $region36: #{tpu_custom_call.1} parent=1 // pred_region
      %v795 = vld [vmem:[#allocation2] sm:$0x3]
      %v796 = vmax.f32 %v795, 0.0
      %v797 = vpack.c.bf16 %v796, %v796
      %v798 = vld [vmem:[#allocation8] sm:$0xf]
      %v799 = vld [vmem:[#allocation8 + $0x4] sm:$0xf]
      %v800 = vld [vmem:[#allocation8 + $0x8] sm:$0xf]
      %v801 = vld [vmem:[#allocation8 + $0xc] sm:$0xf]
      %v802 = vld [vmem:[#allocation8 + $0x10] sm:$0xf]
      %v803 = vld [vmem:[#allocation8 + $0x14] sm:$0xf]
      %v804 = vld [vmem:[#allocation8 + $0x18] sm:$0xf]
      %v805 = vld [vmem:[#allocation8 + $0x1c] sm:$0xf]
      %v806 = vld [vmem:[#allocation8 + $0x20] sm:$0xf]
      %v807 = vld [vmem:[#allocation8 + $0x24] sm:$0xf]
      %v808 = vld [vmem:[#allocation8 + $0x28] sm:$0xf]
      %v809 = vld [vmem:[#allocation8 + $0x2c] sm:$0xf]
      %v810 = vld [vmem:[#allocation8 + $0x30] sm:$0xf]
      %v811 = vld [vmem:[#allocation8 + $0x34] sm:$0xf]
      %v812 = vld [vmem:[#allocation8 + $0x38] sm:$0xf]
      %v813 = vld [vmem:[#allocation8 + $0x3c] sm:$0xf]
      %v814 = vld [vmem:[%s3] sm:$0x1]
      %v816 = vlaneseq
      %v817 = vshrl.u32 %v816, 7
      %v818 = vsub.s32 0, %v817
      %v819 = vrot.slane %v814, %v818
      %v837 = vunpack.c.l.b16 %v798
      %v838 = vunpack.c.l.b16 %v799
      %v839 = vunpack.c.l.b16 %v800
      %v840 = vunpack.c.l.b16 %v801
      %v841 = vunpack.c.l.b16 %v802
      %v842 = vunpack.c.l.b16 %v803
      %v843 = vunpack.c.l.b16 %v804
      %v844 = vunpack.c.l.b16 %v805
      %v845 = vunpack.c.l.b16 %v806
      %v846 = vunpack.c.l.b16 %v807
      %v847 = vunpack.c.l.b16 %v808
      %v848 = vunpack.c.l.b16 %v809
      %v849 = vunpack.c.l.b16 %v810
      %v850 = vunpack.c.l.b16 %v811
      %v851 = vunpack.c.l.b16 %v812
      %v852 = vunpack.c.l.b16 %v813
      %v853 = vpack.c.b16 %v838, %v837
      %v854 = vpack.c.b16 %v840, %v839
      %v855 = vpack.c.b16 %v842, %v841
      %v856 = vpack.c.b16 %v844, %v843
      %v857 = vpack.c.b16 %v846, %v845
      %v858 = vpack.c.b16 %v848, %v847
      %v859 = vpack.c.b16 %v850, %v849
      %v860 = vpack.c.b16 %v852, %v851
      %869 = vmatprep.subr.bf16.mxu0 0
      %870 = vmatpush1.bf16.msra.mxu0 %v853
      %871 = vmatprep.subr.bf16.mxu0 0
      %872 = vmatpush1.bf16.msra.mxu0 %v854
      %873 = vmatprep.subr.bf16.mxu0 0
      %874 = vmatpush1.bf16.msra.mxu0 %v855
      %875 = vmatprep.subr.bf16.mxu0 0
      %876 = vmatpush1.bf16.msra.mxu0 %v856
      %877 = vmatprep.subr.bf16.mxu0 0
      %878 = vmatpush1.bf16.msra.mxu0 %v857
      %879 = vmatprep.subr.bf16.mxu0 0
      %880 = vmatpush1.bf16.msra.mxu0 %v858
      %881 = vmatprep.subr.bf16.mxu0 0
      %882 = vmatpush1.bf16.msra.mxu0 %v859
      %883 = vmatprep.subr.bf16.mxu0 0
      %884 = vmatpush1.bf16.msra.mxu0 %v860
      %885 = vmatprep.subr.bf16.mxu0 0
      %886 = vmatpush1.bf16.msra.mxu0 0
      %887 = vmatprep.subr.bf16.mxu0 0
      %888 = vmatpush1.bf16.msra.mxu0 0
      %889 = vmatprep.subr.bf16.mxu0 0
      %890 = vmatpush1.bf16.msra.mxu0 0
      %891 = vmatprep.subr.bf16.mxu0 0
      %892 = vmatpush1.bf16.msra.mxu0 0
      %893 = vmatprep.subr.bf16.mxu0 0
      %894 = vmatpush1.bf16.msra.mxu0 0
      %895 = vmatprep.subr.bf16.mxu0 0
      %896 = vmatpush1.bf16.msra.mxu0 0
      %897 = vmatprep.subr.bf16.mxu0 0
      %898 = vmatpush1.bf16.msra.mxu0 0
      %899 = vmatprep.subr.bf16.mxu0 0
      %900 = vmatpush1.bf16.msra.mxu0 0
      %901 = vmatprep.mubr.bf16.mxu0 0
      %902 = vmatmul.mubr.bf16.gmra.mrb[0].mxu0 %v797
      %v903 = vpop.f32.mrb[0].mxu0
      %v904 = vadd.f32 %v819, %v903
      %v905 = vpop.f32.mrb[0].mxu0
      %v906 = vpop.f32.mrb[0].mxu0
      %v907 = vpop.f32.mrb[0].mxu0
      %908 = vdwg.mxu0
      %909 = vst [vmem:[#allocation9] sm:$0x3] %v904
    $region37: #{tpu_custom_call.1} parent=1 // pred_fallthru
      _
    // Predicated region
    $region38: #{tpu_custom_call.1} parent=1 // pred_check
      _
    $region39: #{tpu_custom_call.1} parent=1 // pred_check_branch
      %911 = sbr.rel (0) target = $region41
    $region40: #{tpu_custom_call.1} parent=1 // pred_region
      %s913 = ssub.s32 32, 32
      %914 = vsyncadd [#allocation5], %s913
      %s916 = sshll.u32 [#allocation9], 4
      %s917 = int_to_ptr.vmem [resolvable:$true] %s916
      %919 = dma.vmem_to_hbm [thread:$0]  %s917, 32, %s4, [#allocation5]
    $region41: #{tpu_custom_call.1} parent=1 // pred_fallthru
      _
    // Predicated region
    $region42: #{tpu_custom_call.1} parent=1 // pred_check
      _
    $region43: #{tpu_custom_call.1} parent=1 // pred_check_branch
      %921 = sbr.rel (0) target = $region45
    $region44: #{tpu_custom_call.1} parent=1 // pred_region
      %922 = dma.done [#allocation5], 32
    $region45: #{tpu_custom_call.1} parent=1 // pred_fallthru
      _
    %923 = vsyncpa [#allocation4], 1
    %924 = vsyncpa [#allocation7], 1
    %925 = vsyncpa [#allocation5], 1

</llo_original>
